<compile_context>
chip_gen: v7x
topology: tpu7x:2x2x1
jax: 0.10.0
libtpu: 0.0.40
codegen_flags: <defaults>
</compile_context>

<pallas_src>
import functools

import jax
import jax.numpy as jnp
from jax import lax
from jax.experimental import pallas as pl
from jax.experimental.pallas import tpu as pltpu


def _me_kernel(x_ref, pool_ref, bcast_ref, wsq_ref, bsq_ref, wc1_ref, bc1_ref,
               wex_ref, bex_ref, out_ref, *, n_segment):
    # x_ref / out_ref: (B_tile, C, T*V) lane-dense block of batch elements.
    b_tile = x_ref.shape[0]
    tv, t = pool_ref.shape
    cr = wsq_ref.shape[0]

    pool = pool_ref[...]        # (TV, T)  mean-over-V matrix
    bcast = bcast_ref[...]      # (T, TV)  broadcast-over-V matrix
    wsq = wsq_ref[...]          # (Cr, C)  squeeze weight with BN folded in
    wc1 = wc1_ref[...]          # (Cr, Cr)
    wex = wex_ref[...]          # (C, Cr)
    bsq = bsq_ref[...]          # (Cr, 1)
    bc1 = bc1_ref[...]          # (Cr, 1)
    bex = bex_ref[...]          # (C, 1)

    # d[t] is zero on the last frame of every n_segment group (reference's split+F.pad).
    t_idx = lax.broadcasted_iota(jnp.int32, (cr, t), 1)
    seg_mask = (t_idx % n_segment) != (n_segment - 1)

    # B_tile is a small static constant -> unrolled loop of plain 2-D matmuls.
    for b in range(b_tile):
        xb = x_ref[b]                                                     # (C, TV)
        # AdaptiveAvgPool2d((None, 1)) pulled in front of the 1x1 convs.
        px = jnp.dot(xb, pool, preferred_element_type=jnp.float32)       # (C, T)
        # me_squeeze + folded eval-mode BatchNorm.
        y = jnp.dot(wsq, px, preferred_element_type=jnp.float32) + bsq   # (Cr, T)
        # me_conv1.
        z = jnp.dot(wc1, y, preferred_element_type=jnp.float32) + bc1    # (Cr, T)
        # Motion difference: d[:, t] = z[:, t+1] - y[:, t] within each segment group.
        z_next = jnp.concatenate([z[:, 1:], z[:, :1]], axis=1)           # (Cr, T)
        d = jnp.where(seg_mask, z_next - y, 0.0)
        # me_expand + sigmoid -> per-(c, t) gate.
        g = jax.nn.sigmoid(
            jnp.dot(wex, d, preferred_element_type=jnp.float32) + bex)   # (C, T)
        # Broadcast the gate over V with a constant matmul (keeps the store lane-dense).
        gate = jnp.dot(g, bcast, preferred_element_type=jnp.float32)     # (C, TV)
        out_ref[b] = xb * gate


def _pick_batch_tile(n, per_elem_bytes, target_bytes=4 << 20, max_unroll=8):
    divisors = [d for d in range(1, n + 1) if n % d == 0]
    fitting = [d for d in divisors
               if d <= max_unroll and d * per_elem_bytes <= target_bytes]
    if not fitting:
        fitting = [1]
    # Prefer a grid length >= 2 so megacore / v7x's two TensorCores both get work.
    preferred = [d for d in fitting if n // d >= 2]
    return max(preferred) if preferred else max(fitting)


def motion_excitation_pallas(x_nctv, params, n_segment=3):
    """x_nctv: (N, C, T, V) float32, PyTorch layout. Returns (N, C, T, V)."""
    n, c, t, v = x_nctv.shape
    cr = params["w_sq"].shape[0]
    assert t % n_segment == 0, "n_segment must divide T (matches the reference grouping)"
    tv = t * v

    # Free reshape (contiguous trailing dims) -> lane-dense streamed layout, no transposes.
    x_flat = x_nctv.reshape(n, c, tv).astype(jnp.float32)

    # Fold eval-mode BatchNorm (running statistics) into the squeeze conv.
    # TODO(synk): training-mode BatchNorm (batch statistics) is not implemented.
    eps = 1e-5
    scale = params["bn_gamma"] / jnp.sqrt(params["bn_var"] + eps)
    shift = params["bn_beta"] - params["bn_mean"] * scale
    wsq = (params["w_sq"] * scale[:, None]).astype(jnp.float32)          # (Cr, C)
    bsq = (params["b_sq"] * scale + shift).reshape(cr, 1).astype(jnp.float32)
    wc1 = params["w_c1"].astype(jnp.float32)                             # (Cr, Cr)
    bc1 = params["b_c1"].reshape(cr, 1).astype(jnp.float32)
    wex = params["w_ex"].astype(jnp.float32)                             # (C, Cr)
    bex = params["b_ex"].reshape(c, 1).astype(jnp.float32)

    # Constant pool / broadcast matrices over V (tiny).
    frame_of = jnp.arange(tv, dtype=jnp.int32) // v
    frames = jnp.arange(t, dtype=jnp.int32)
    pool = (frame_of[:, None] == frames[None, :]).astype(jnp.float32) / float(v)  # (TV, T)
    bcast = (frames[:, None] == frame_of[None, :]).astype(jnp.float32)            # (T, TV)

    # Batch tiling: ~4 MiB lane-dense blocks, grid >= 2 when possible, bounded unroll.
    per_elem_bytes = c * tv * 4
    b_tile = _pick_batch_tile(n, per_elem_bytes)
    grid = (n // b_tile,)
    block_bytes = b_tile * per_elem_bytes
    # Double-buffered in + out + constants; clamp to leave headroom in v7x's 64 MiB VMEM.
    vmem_limit = int(min(max(6 * block_bytes + (4 << 20), 16 << 20), 48 << 20))

    cost = pl.CostEstimate(
        flops=int(2 * n * c * tv * t * 2                    # pool + broadcast matmuls
                  + 2 * n * t * (2 * c * cr + cr * cr)      # squeeze / conv1 / expand
                  + n * c * tv),                            # gate multiply
        transcendentals=int(n * t * c),                     # sigmoid
        bytes_accessed=int(8 * n * c * tv),                 # stream x in, stream out
    )

    kernel = functools.partial(_me_kernel, n_segment=n_segment)
    const2d = lambda shape: pl.BlockSpec(shape, lambda i: (0, 0))

    out = pl.pallas_call(
        kernel,
        out_shape=jax.ShapeDtypeStruct((n, c, tv), jnp.float32),
        grid_spec=pltpu.PrefetchScalarGridSpec(
            num_scalar_prefetch=0,
            grid=grid,
            in_specs=[
                pl.BlockSpec((b_tile, c, tv), lambda i: (i, 0, 0)),
                const2d((tv, t)),    # pool-over-V matrix
                const2d((t, tv)),    # broadcast-over-V matrix
                const2d((cr, c)),    # w_squeeze (BN folded)
                const2d((cr, 1)),    # b_squeeze (BN folded)
                const2d((cr, cr)),   # w_conv1
                const2d((cr, 1)),    # b_conv1
                const2d((c, cr)),    # w_expand
                const2d((c, 1)),     # b_expand
            ],
            out_specs=pl.BlockSpec((b_tile, c, tv), lambda i: (i, 0, 0)),
        ),
        compiler_params=pltpu.CompilerParams(
            dimension_semantics=("parallel",),
            vmem_limit_bytes=vmem_limit),
        cost_estimate=cost,
    )(x_flat, pool, bcast, wsq, bsq, wc1, bc1, wex, bex)

    return out.reshape(n, c, t, v)


def motion_excitation_ref(x, params, n_segment=3):
    """Pure-JAX replica of the PyTorch forward (eval-mode BN), NCTV layout."""
    n, c, t, v = x.shape
    cr = params["w_sq"].shape[0]
    eps = 1e-5
    scale = params["bn_gamma"] / jnp.sqrt(params["bn_var"] + eps)
    shift = params["bn_beta"] - params["bn_mean"] * scale

    y = jnp.einsum("nctv,rc->nrtv", x, params["w_sq"]) + params["b_sq"][None, :, None, None]
    y = y * scale[None, :, None, None] + shift[None, :, None, None]
    z = jnp.einsum("nrtv,sr->nstv", y, params["w_c1"]) + params["b_c1"][None, :, None, None]

    nt = n * t
    nb = nt // n_segment
    y_nt = jnp.transpose(y, (0, 2, 1, 3)).reshape(nt, cr, v)
    z_nt = jnp.transpose(z, (0, 2, 1, 3)).reshape(nt, cr, v)
    x_plus0 = y_nt.reshape(nb, n_segment, cr, v)[:, : n_segment - 1]
    x_plus1 = z_nt.reshape(nb, n_segment, cr, v)[:, 1:]
    x_me = x_plus1 - x_plus0
    x_me = jnp.pad(x_me, ((0, 0), (0, 1), (0, 0), (0, 0)))
    x_me = jnp.transpose(x_me.reshape(n, t, cr, v), (0, 2, 1, 3))
    x_me = jnp.mean(x_me, axis=3, keepdims=True)
    x_me = jnp.einsum("nrtv,cr->nctv", x_me, params["w_ex"]) + params["b_ex"][None, :, None, None]
    return x * jax.nn.sigmoid(x_me)


if __name__ == "__main__":
    n, c, t, v = 2, 32, 6, 16          # in_channels=32 -> reduced_channels=2, n_segment=3
    cr = c // 16

    keys = jax.random.split(jax.random.PRNGKey(0), 11)
    x = jax.random.normal(keys[0], (n, c, t, v), jnp.float32)
    params = dict(
        w_sq=jax.random.normal(keys[1], (cr, c), jnp.float32) * 0.1,
        b_sq=jax.random.normal(keys[2], (cr,), jnp.float32) * 0.1,
        bn_gamma=1.0 + jax.random.normal(keys[3], (cr,), jnp.float32) * 0.1,
        bn_beta=jax.random.normal(keys[4], (cr,), jnp.float32) * 0.1,
        bn_mean=jax.random.normal(keys[5], (cr,), jnp.float32) * 0.1,
        bn_var=1.0 + jax.random.uniform(keys[6], (cr,), jnp.float32) * 0.1,
        w_c1=jax.random.normal(keys[7], (cr, cr), jnp.float32) * 0.1,
        b_c1=jax.random.normal(keys[8], (cr,), jnp.float32) * 0.1,
        w_ex=jax.random.normal(keys[9], (c, cr), jnp.float32) * 0.1,
        b_ex=jax.random.normal(keys[10], (c,), jnp.float32) * 0.1,
    )

    out = jax.block_until_ready(motion_excitation_pallas(x, params))
    ref = motion_excitation_ref(x, params)
    max_err = float(jnp.max(jnp.abs(out - ref)))
    assert out.shape == (n, c, t, v)
    assert max_err < 1e-4, f"mismatch vs reference: {max_err}"
    print("KERNEL_OK")
</pallas_src>

<mosaic_0001>
module attributes {stable_mosaic.version = 11 : i64} {
  func.func @_me_kernel(%arg0: i32, %arg1: memref<1x32x96xf32, #tpu.memory_space<vmem>>, %arg2: memref<96x6xf32, #tpu.memory_space<vmem>>, %arg3: memref<6x96xf32, #tpu.memory_space<vmem>>, %arg4: memref<2x32xf32, #tpu.memory_space<vmem>>, %arg5: memref<2x1xf32, #tpu.memory_space<vmem>>, %arg6: memref<2x2xf32, #tpu.memory_space<vmem>>, %arg7: memref<2x1xf32, #tpu.memory_space<vmem>>, %arg8: memref<32x2xf32, #tpu.memory_space<vmem>>, %arg9: memref<32x1xf32, #tpu.memory_space<vmem>>, %arg10: memref<1x32x96xf32, #tpu.memory_space<vmem>>) attributes {dimension_semantics = [#tpu.dimension_semantics<parallel>], iteration_bounds = array<i64: 2>, scalar_prefetch = 0 : i64, scratch_operands = 0 : i64, tpu.core_type = #tpu.core_type<tc>, window_params = [{transform_indices = @transform_0, window_bounds = array<i64: 1, 32, 96>}, {pipeline_mode = #tpu.pipeline_mode<synchronous>, transform_indices = @transform_1, window_bounds = array<i64: 96, 6>}, {pipeline_mode = #tpu.pipeline_mode<synchronous>, transform_indices = @transform_2, window_bounds = array<i64: 6, 96>}, {pipeline_mode = #tpu.pipeline_mode<synchronous>, transform_indices = @transform_3, window_bounds = array<i64: 2, 32>}, {pipeline_mode = #tpu.pipeline_mode<synchronous>, transform_indices = @transform_4, window_bounds = array<i64: 2, 1>}, {pipeline_mode = #tpu.pipeline_mode<synchronous>, transform_indices = @transform_5, window_bounds = array<i64: 2, 2>}, {pipeline_mode = #tpu.pipeline_mode<synchronous>, transform_indices = @transform_6, window_bounds = array<i64: 2, 1>}, {pipeline_mode = #tpu.pipeline_mode<synchronous>, transform_indices = @transform_7, window_bounds = array<i64: 32, 2>}, {pipeline_mode = #tpu.pipeline_mode<synchronous>, transform_indices = @transform_8, window_bounds = array<i64: 32, 1>}, {transform_indices = @transform_9, window_bounds = array<i64: 1, 32, 96>}]} {
    %c0 = arith.constant 0 : index
    %c0_0 = arith.constant 0 : index
    %0 = vector.load %arg2[%c0, %c0_0] : memref<96x6xf32, #tpu.memory_space<vmem>>, vector<96x6xf32>
    %c0_1 = arith.constant 0 : index
    %c0_2 = arith.constant 0 : index
    %1 = vector.load %arg3[%c0_1, %c0_2] : memref<6x96xf32, #tpu.memory_space<vmem>>, vector<6x96xf32>
    %c0_3 = arith.constant 0 : index
    %c0_4 = arith.constant 0 : index
    %2 = vector.load %arg4[%c0_3, %c0_4] : memref<2x32xf32, #tpu.memory_space<vmem>>, vector<2x32xf32>
    %c0_5 = arith.constant 0 : index
    %c0_6 = arith.constant 0 : index
    %3 = vector.load %arg6[%c0_5, %c0_6] : memref<2x2xf32, #tpu.memory_space<vmem>>, vector<2x2xf32>
    %c0_7 = arith.constant 0 : index
    %c0_8 = arith.constant 0 : index
    %4 = vector.load %arg8[%c0_7, %c0_8] : memref<32x2xf32, #tpu.memory_space<vmem>>, vector<32x2xf32>
    %c0_9 = arith.constant 0 : index
    %c0_10 = arith.constant 0 : index
    %5 = vector.load %arg5[%c0_9, %c0_10] : memref<2x1xf32, #tpu.memory_space<vmem>>, vector<2x1xf32>
    %c0_11 = arith.constant 0 : index
    %c0_12 = arith.constant 0 : index
    %6 = vector.load %arg7[%c0_11, %c0_12] : memref<2x1xf32, #tpu.memory_space<vmem>>, vector<2x1xf32>
    %c0_13 = arith.constant 0 : index
    %c0_14 = arith.constant 0 : index
    %7 = vector.load %arg9[%c0_13, %c0_14] : memref<32x1xf32, #tpu.memory_space<vmem>>, vector<32x1xf32>
    %8 = tpu.iota {dimensions = array<i32: 1>} : vector<2x6xi32>
    %c3_i32 = arith.constant 3 : i32
    %c0_i32 = arith.constant 0 : i32
    %9 = arith.cmpi eq, %c3_i32, %c0_i32 : i32
    %c1_i32 = arith.constant 1 : i32
    %10 = arith.select %9, %c1_i32, %c3_i32 : i32
    %11 = vector.broadcast %10 : i32 to vector<2x6xi32>
    %12 = arith.remsi %8, %11 : vector<2x6xi32>
    %c0_i32_15 = arith.constant 0 : i32
    %13 = vector.broadcast %c0_i32_15 : i32 to vector<2x6xi32>
    %14 = arith.cmpi ne, %12, %13 : vector<2x6xi32>
    %c0_i32_16 = arith.constant 0 : i32
    %15 = vector.broadcast %c0_i32_16 : i32 to vector<2x6xi32>
    %16 = arith.cmpi slt, %12, %15 : vector<2x6xi32>
    %c0_i32_17 = arith.constant 0 : i32
    %17 = arith.cmpi slt, %10, %c0_i32_17 : i32
    %18 = vector.broadcast %17 : i1 to vector<2x6xi1>
    %19 = vector.broadcast %18 : vector<2x6xi1> to vector<2x6xi1>
    %20 = arith.xori %16, %19 : vector<2x6xi1>
    %21 = arith.andi %20, %14 : vector<2x6xi1>
    %22 = vector.broadcast %10 : i32 to vector<2x6xi32>
    %23 = arith.addi %12, %22 : vector<2x6xi32>
    %24 = arith.select %21, %23, %12 : vector<2x6xi1>, vector<2x6xi32>
    %c2_i32 = arith.constant 2 : i32
    %25 = vector.broadcast %c2_i32 : i32 to vector<2x6xi32>
    %26 = arith.cmpi ne, %24, %25 : vector<2x6xi32>
    %c0_18 = arith.constant 0 : index
    %c0_19 = arith.constant 0 : index
    %c0_20 = arith.constant 0 : index
    %27 = vector.load %arg1[%c0_18, %c0_19, %c0_20] : memref<1x32x96xf32, #tpu.memory_space<vmem>>, vector<1x32x96xf32>
    %28 = vector.shape_cast %27 : vector<1x32x96xf32> to vector<32x96xf32>
    %cst = arith.constant dense<0.000000e+00> : vector<32x6xf32>
    %29 = tpu.matmul %28, %0, %cst {dimension_numbers = #tpu.dot_dimension_numbers<[1], [0], [0], [1], [0, 0, 1, 1], [], []>} : vector<32x96xf32>, vector<96x6xf32>, vector<32x6xf32> -> vector<32x6xf32>
    %cst_21 = arith.constant dense<0.000000e+00> : vector<2x6xf32>
    %30 = tpu.matmul %2, %29, %cst_21 {dimension_numbers = #tpu.dot_dimension_numbers<[1], [0], [0], [1], [0, 0, 1, 1], [], []>} : vector<2x32xf32>, vector<32x6xf32>, vector<2x6xf32> -> vector<2x6xf32>
    %31 = vector.broadcast %5 : vector<2x1xf32> to vector<2x6xf32>
    %32 = arith.addf %30, %31 : vector<2x6xf32>
    %cst_22 = arith.constant dense<0.000000e+00> : vector<2x6xf32>
    %33 = tpu.matmul %3, %32, %cst_22 {dimension_numbers = #tpu.dot_dimension_numbers<[1], [0], [0], [1], [0, 0, 1, 1], [], []>} : vector<2x2xf32>, vector<2x6xf32>, vector<2x6xf32> -> vector<2x6xf32>
    %34 = vector.broadcast %6 : vector<2x1xf32> to vector<2x6xf32>
    %35 = arith.addf %33, %34 : vector<2x6xf32>
    %36 = vector.extract_strided_slice %35 {offsets = [0, 1], sizes = [2, 5], strides = [1, 1]} : vector<2x6xf32> to vector<2x5xf32>
    %37 = vector.extract_strided_slice %35 {offsets = [0, 0], sizes = [2, 1], strides = [1, 1]} : vector<2x6xf32> to vector<2x1xf32>
    %38 = tpu.concatenate %36, %37 in 1 : vector<2x5xf32>, vector<2x1xf32> -> vector<2x6xf32>
    %39 = arith.subf %38, %32 : vector<2x6xf32>
    %cst_23 = arith.constant 0.000000e+00 : f32
    %40 = vector.broadcast %cst_23 : f32 to vector<2x6xf32>
    %41 = arith.select %26, %39, %40 : vector<2x6xi1>, vector<2x6xf32>
    %cst_24 = arith.constant dense<0.000000e+00> : vector<32x6xf32>
    %42 = tpu.matmul %4, %41, %cst_24 {dimension_numbers = #tpu.dot_dimension_numbers<[1], [0], [0], [1], [0, 0, 1, 1], [], []>} : vector<32x2xf32>, vector<2x6xf32>, vector<32x6xf32> -> vector<32x6xf32>
    %43 = vector.broadcast %7 : vector<32x1xf32> to vector<32x6xf32>
    %44 = arith.addf %42, %43 : vector<32x6xf32>
    %45 = arith.negf %44 : vector<32x6xf32>
    %46 = math.exp %45 : vector<32x6xf32>
    %cst_25 = arith.constant 1.000000e+00 : f32
    %47 = vector.broadcast %cst_25 : f32 to vector<32x6xf32>
    %48 = arith.addf %47, %46 : vector<32x6xf32>
    %49 = arith.divf %47, %48 : vector<32x6xf32>
    %cst_26 = arith.constant dense<0.000000e+00> : vector<32x96xf32>
    %50 = tpu.matmul %49, %1, %cst_26 {dimension_numbers = #tpu.dot_dimension_numbers<[1], [0], [0], [1], [0, 0, 1, 1], [], []>} : vector<32x6xf32>, vector<6x96xf32>, vector<32x96xf32> -> vector<32x96xf32>
    %51 = arith.mulf %28, %50 : vector<32x96xf32>
    %c0_27 = arith.constant 0 : index
    %c0_28 = arith.constant 0 : index
    %c0_29 = arith.constant 0 : index
    %52 = vector.load %arg10[%c0_27, %c0_28, %c0_29] : memref<1x32x96xf32, #tpu.memory_space<vmem>>, vector<1x32x96xf32>
    %53 = vector.shape_cast %52 : vector<1x32x96xf32> to vector<32x96xf32>
    %54 = vector.shape_cast %51 : vector<32x96xf32> to vector<1x32x96xf32>
    tpu.vector_store %arg10[%c0_27, %c0_28, %c0_29], %54 {strides = array<i32>} : memref<1x32x96xf32, #tpu.memory_space<vmem>>, vector<1x32x96xf32>,
    return
  }
  func.func @transform_0(%arg0: i32) -> (i32, i32, i32) {
    %c0_i32 = arith.constant 0 : i32
    %c0_i32_0 = arith.constant 0 : i32
    %c0_i32_1 = arith.constant 0 : i32
    return %arg0, %c0_i32, %c0_i32_0 : i32, i32, i32
  }
  func.func @transform_1(%arg0: i32) -> (i32, i32) {
    %c0_i32 = arith.constant 0 : i32
    %c0_i32_0 = arith.constant 0 : i32
    %c0_i32_1 = arith.constant 0 : i32
    return %c0_i32, %c0_i32_0 : i32, i32
  }
  func.func @transform_2(%arg0: i32) -> (i32, i32) {
    %c0_i32 = arith.constant 0 : i32
    %c0_i32_0 = arith.constant 0 : i32
    %c0_i32_1 = arith.constant 0 : i32
    return %c0_i32, %c0_i32_0 : i32, i32
  }
  func.func @transform_3(%arg0: i32) -> (i32, i32) {
    %c0_i32 = arith.constant 0 : i32
    %c0_i32_0 = arith.constant 0 : i32
    %c0_i32_1 = arith.constant 0 : i32
    return %c0_i32, %c0_i32_0 : i32, i32
  }
  func.func @transform_4(%arg0: i32) -> (i32, i32) {
    %c0_i32 = arith.constant 0 : i32
    %c0_i32_0 = arith.constant 0 : i32
    %c0_i32_1 = arith.constant 0 : i32
    return %c0_i32, %c0_i32_0 : i32, i32
  }
  func.func @transform_5(%arg0: i32) -> (i32, i32) {
    %c0_i32 = arith.constant 0 : i32
    %c0_i32_0 = arith.constant 0 : i32
    %c0_i32_1 = arith.constant 0 : i32
    return %c0_i32, %c0_i32_0 : i32, i32
  }
  func.func @transform_6(%arg0: i32) -> (i32, i32) {
    %c0_i32 = arith.constant 0 : i32
    %c0_i32_0 = arith.constant 0 : i32
    %c0_i32_1 = arith.constant 0 : i32
    return %c0_i32, %c0_i32_0 : i32, i32
  }
  func.func @transform_7(%arg0: i32) -> (i32, i32) {
    %c0_i32 = arith.constant 0 : i32
    %c0_i32_0 = arith.constant 0 : i32
    %c0_i32_1 = arith.constant 0 : i32
    return %c0_i32, %c0_i32_0 : i32, i32
  }
  func.func @transform_8(%arg0: i32) -> (i32, i32) {
    %c0_i32 = arith.constant 0 : i32
    %c0_i32_0 = arith.constant 0 : i32
    %c0_i32_1 = arith.constant 0 : i32
    return %c0_i32, %c0_i32_0 : i32, i32
  }
  func.func @transform_9(%arg0: i32) -> (i32, i32, i32) {
    %c0_i32 = arith.constant 0 : i32
    %c0_i32_0 = arith.constant 0 : i32
    %c0_i32_1 = arith.constant 0 : i32
    return %arg0, %c0_i32, %c0_i32_0 : i32, i32, i32
  }
}

</mosaic_0001>

<llo_original>
// kernel: tpu_custom_call.1
$region0: #{tpu_custom_call.1}
  #allocation0 [shape = 'u32[]', space=smem, size = 0x4, offset = 0x4, fixed_abs, tag = 'smem constant byte address 0x4 - core index']
  #allocation1 [shape = 'u32[144,128]{1,0:T(1,128)}', space=vmem, size = 0x12000, scoped, tag = 'internal scratch']
  %s0 = inlined_call_operand.vmem [shape: f32[2,32,96], index: 0, kind: input, shape index: {}]
  %s1 = inlined_call_operand.vmem [shape: f32[96,6], index: 1, kind: input, shape index: {}]
  %s2 = inlined_call_operand.vmem [shape: f32[6,96], index: 2, kind: input, shape index: {}]
  %s3 = inlined_call_operand.vmem [shape: f32[2,32], index: 3, kind: input, shape index: {}]
  %s4 = inlined_call_operand.vmem [shape: f32[2,1], index: 4, kind: input, shape index: {}]
  %s5 = inlined_call_operand.vmem [shape: f32[2,2], index: 5, kind: input, shape index: {}]
  %s6 = inlined_call_operand.vmem [shape: f32[2,1], index: 6, kind: input, shape index: {}]
  %s7 = inlined_call_operand.vmem [shape: f32[32,2], index: 7, kind: input, shape index: {}]
  %s8 = inlined_call_operand.vmem [shape: f32[32,1], index: 8, kind: input, shape index: {}]
  %s9 = inlined_call_operand.hbm [shape: f32[2,32,96], index: 9, kind: output, shape index: {}]
  %s10 = sld [smem:[#allocation0]]
  $region69: #{tpu_custom_call.1} parent=0
    _
  %s12 = ssub.s32 1, %s10
  %s13 = scalar_select 0, %s12, %s10
  $region1: #{tpu_custom_call.1} parent=0
    #allocation2 [shape = 'u8[32768]{0}', space=vmem, size = 0x8000, scoped, tag = 'output window, operand 0']
    #allocation3 [shape = 's32[2]{0}', space=sflag, size = 0x8, scoped, tag = 'scoped memory for tpu_custom_call.1']
    %14 = vsyncpa [#allocation3], 0
    %s15 = scalar_lea.sflag [#allocation3], 1
    %16 = vsyncpa %s15, 0
    loop: start=0, step=1, limit=4
    $region2: #{tpu_custom_call.1} parent=1 // loop_pre_header
      _
    $region3: #{tpu_custom_call.1} parent=1 // loop_header
      %s18 = sphi 0, %s22
      %p19 = scmp.ge.s32.totalorder %s18, 4
      %s28 = sphi 0, %s30
      %s31 = sphi 0, %s28
      %s32 = sphi 0, %s31
      %s48 = sphi 0, %s32
      %s52 = sphi 0, %s52
      %s54 = sphi 0, %s52
      %s55 = sphi 0, %s54
      %s69 = sphi 0, %s55
      %s73 = sphi 0, %s73
      %s75 = sphi 0, %s73
      %s76 = sphi 0, %s75
      %s90 = sphi 0, %s76
      %s94 = sphi 0, %s94
      %s96 = sphi 0, %s94
      %s97 = sphi 0, %s96
      %s111 = sphi 0, %s97
      %s115 = sphi 0, %s115
      %s117 = sphi 0, %s115
      %s118 = sphi 0, %s117
      %s132 = sphi 0, %s118
      %s136 = sphi 0, %s136
      %s138 = sphi 0, %s136
      %s139 = sphi 0, %s138
      %s153 = sphi 0, %s139
      %s157 = sphi 0, %s157
      %s159 = sphi 0, %s157
      %s160 = sphi 0, %s159
      %s174 = sphi 0, %s160
      %s178 = sphi 0, %s178
      %s180 = sphi 0, %s178
      %s181 = sphi 0, %s180
      %s195 = sphi 0, %s181
      %s199 = sphi 0, %s199
      %s201 = sphi 0, %s199
      %s202 = sphi 0, %s201
      %s216 = sphi 0, %s202
      %s222 = sphi 0, %s224
      %s225 = sphi 0, %s222
      %s226 = sphi 0, %s225
      %s242 = sphi 0, %s226
    $region4: #{tpu_custom_call.1} parent=1 // loop_header_branch
      %21 = sbr.rel (%p19) target = $region8
    $region5: #{tpu_custom_call.1} parent=1 // loop_body
      %s23 = ssub.s32 %s18, 1
      %s24 = ssub.s32 %s18, 2
      %s25 = sadd.s32 %s18, 1
      %s26 = ssub.s32 %s18, %s25
      %p27 = scmp.eq.s32.totalorder %s26, 0
      %s29 = sadd.s32 %s28, 1
      %s30 = scalar_select %p27, %s28, %s29
      %p33 = pneg %p27
      %p34 = scmp.eq.s32.totalorder %s18, 1
      %p35 = por %p33, %p34
      %p36 = scmp.ne.s32.totalorder %s28, %s31
      %p37 = scmp.eq.s32.totalorder %s18, 0
      %p38 = por %p36, %p37
      %p39 = scmp.ne.s32.totalorder %s28, %s31
      %p40 = scmp.eq.s32.totalorder %s23, 1
      %p41 = por %p39, %p40
      %p42 = scmp.ne.s32.totalorder %s31, %s32
      %p43 = scmp.eq.s32.totalorder %s23, 0
      %p44 = por %p42, %p43
      %p45 = scmp.ne.s32.totalorder %s31, %s32
      %p46 = scmp.eq.s32.totalorder %s24, 1
      %p47 = por %p45, %p46
      %p49 = scmp.ne.s32.totalorder %s32, %s48
      %p50 = scmp.eq.s32.totalorder %s24, 0
      %p51 = por %p49, %p50
      %s53 = sadd.s32 %s52, 1
      %p56 = scmp.eq.s32.totalorder %s18, 1
      %p57 = scmp.ne.s32.totalorder %s52, %s54
      %p58 = scmp.eq.s32.totalorder %s18, 0
      %p59 = por %p57, %p58
      %p60 = scmp.ne.s32.totalorder %s52, %s54
      %p61 = scmp.eq.s32.totalorder %s23, 1
      %p62 = por %p60, %p61
      %p63 = scmp.ne.s32.totalorder %s54, %s55
      %p64 = scmp.eq.s32.totalorder %s23, 0
      %p65 = por %p63, %p64
      %p66 = scmp.ne.s32.totalorder %s54, %s55
      %p67 = scmp.eq.s32.totalorder %s24, 1
      %p68 = por %p66, %p67
      %p70 = scmp.ne.s32.totalorder %s55, %s69
      %p71 = scmp.eq.s32.totalorder %s24, 0
      %p72 = por %p70, %p71
      %s74 = sadd.s32 %s73, 1
      %p77 = scmp.eq.s32.totalorder %s18, 1
      %p78 = scmp.ne.s32.totalorder %s73, %s75
      %p79 = scmp.eq.s32.totalorder %s18, 0
      %p80 = por %p78, %p79
      %p81 = scmp.ne.s32.totalorder %s73, %s75
      %p82 = scmp.eq.s32.totalorder %s23, 1
      %p83 = por %p81, %p82
      %p84 = scmp.ne.s32.totalorder %s75, %s76
      %p85 = scmp.eq.s32.totalorder %s23, 0
      %p86 = por %p84, %p85
      %p87 = scmp.ne.s32.totalorder %s75, %s76
      %p88 = scmp.eq.s32.totalorder %s24, 1
      %p89 = por %p87, %p88
      %p91 = scmp.ne.s32.totalorder %s76, %s90
      %p92 = scmp.eq.s32.totalorder %s24, 0
      %p93 = por %p91, %p92
      %s95 = sadd.s32 %s94, 1
      %p98 = scmp.eq.s32.totalorder %s18, 1
      %p99 = scmp.ne.s32.totalorder %s94, %s96
      %p100 = scmp.eq.s32.totalorder %s18, 0
      %p101 = por %p99, %p100
      %p102 = scmp.ne.s32.totalorder %s94, %s96
      %p103 = scmp.eq.s32.totalorder %s23, 1
      %p104 = por %p102, %p103
      %p105 = scmp.ne.s32.totalorder %s96, %s97
      %p106 = scmp.eq.s32.totalorder %s23, 0
      %p107 = por %p105, %p106
      %p108 = scmp.ne.s32.totalorder %s96, %s97
      %p109 = scmp.eq.s32.totalorder %s24, 1
      %p110 = por %p108, %p109
      %p112 = scmp.ne.s32.totalorder %s97, %s111
      %p113 = scmp.eq.s32.totalorder %s24, 0
      %p114 = por %p112, %p113
      %s116 = sadd.s32 %s115, 1
      %p119 = scmp.eq.s32.totalorder %s18, 1
      %p120 = scmp.ne.s32.totalorder %s115, %s117
      %p121 = scmp.eq.s32.totalorder %s18, 0
      %p122 = por %p120, %p121
      %p123 = scmp.ne.s32.totalorder %s115, %s117
      %p124 = scmp.eq.s32.totalorder %s23, 1
      %p125 = por %p123, %p124
      %p126 = scmp.ne.s32.totalorder %s117, %s118
      %p127 = scmp.eq.s32.totalorder %s23, 0
      %p128 = por %p126, %p127
      %p129 = scmp.ne.s32.totalorder %s117, %s118
      %p130 = scmp.eq.s32.totalorder %s24, 1
      %p131 = por %p129, %p130
      %p133 = scmp.ne.s32.totalorder %s118, %s132
      %p134 = scmp.eq.s32.totalorder %s24, 0
      %p135 = por %p133, %p134
      %s137 = sadd.s32 %s136, 1
      %p140 = scmp.eq.s32.totalorder %s18, 1
      %p141 = scmp.ne.s32.totalorder %s136, %s138
      %p142 = scmp.eq.s32.totalorder %s18, 0
      %p143 = por %p141, %p142
      %p144 = scmp.ne.s32.totalorder %s136, %s138
      %p145 = scmp.eq.s32.totalorder %s23, 1
      %p146 = por %p144, %p145
      %p147 = scmp.ne.s32.totalorder %s138, %s139
      %p148 = scmp.eq.s32.totalorder %s23, 0
      %p149 = por %p147, %p148
      %p150 = scmp.ne.s32.totalorder %s138, %s139
      %p151 = scmp.eq.s32.totalorder %s24, 1
      %p152 = por %p150, %p151
      %p154 = scmp.ne.s32.totalorder %s139, %s153
      %p155 = scmp.eq.s32.totalorder %s24, 0
      %p156 = por %p154, %p155
      %s158 = sadd.s32 %s157, 1
      %p161 = scmp.eq.s32.totalorder %s18, 1
      %p162 = scmp.ne.s32.totalorder %s157, %s159
      %p163 = scmp.eq.s32.totalorder %s18, 0
      %p164 = por %p162, %p163
      %p165 = scmp.ne.s32.totalorder %s157, %s159
      %p166 = scmp.eq.s32.totalorder %s23, 1
      %p167 = por %p165, %p166
      %p168 = scmp.ne.s32.totalorder %s159, %s160
      %p169 = scmp.eq.s32.totalorder %s23, 0
      %p170 = por %p168, %p169
      %p171 = scmp.ne.s32.totalorder %s159, %s160
      %p172 = scmp.eq.s32.totalorder %s24, 1
      %p173 = por %p171, %p172
      %p175 = scmp.ne.s32.totalorder %s160, %s174
      %p176 = scmp.eq.s32.totalorder %s24, 0
      %p177 = por %p175, %p176
      %s179 = sadd.s32 %s178, 1
      %p182 = scmp.eq.s32.totalorder %s18, 1
      %p183 = scmp.ne.s32.totalorder %s178, %s180
      %p184 = scmp.eq.s32.totalorder %s18, 0
      %p185 = por %p183, %p184
      %p186 = scmp.ne.s32.totalorder %s178, %s180
      %p187 = scmp.eq.s32.totalorder %s23, 1
      %p188 = por %p186, %p187
      %p189 = scmp.ne.s32.totalorder %s180, %s181
      %p190 = scmp.eq.s32.totalorder %s23, 0
      %p191 = por %p189, %p190
      %p192 = scmp.ne.s32.totalorder %s180, %s181
      %p193 = scmp.eq.s32.totalorder %s24, 1
      %p194 = por %p192, %p193
      %p196 = scmp.ne.s32.totalorder %s181, %s195
      %p197 = scmp.eq.s32.totalorder %s24, 0
      %p198 = por %p196, %p197
      %s200 = sadd.s32 %s199, 1
      %p203 = scmp.eq.s32.totalorder %s18, 1
      %p204 = scmp.ne.s32.totalorder %s199, %s201
      %p205 = scmp.eq.s32.totalorder %s18, 0
      %p206 = por %p204, %p205
      %p207 = scmp.ne.s32.totalorder %s199, %s201
      %p208 = scmp.eq.s32.totalorder %s23, 1
      %p209 = por %p207, %p208
      %p210 = scmp.ne.s32.totalorder %s201, %s202
      %p211 = scmp.eq.s32.totalorder %s23, 0
      %p212 = por %p210, %p211
      %p213 = scmp.ne.s32.totalorder %s201, %s202
      %p214 = scmp.eq.s32.totalorder %s24, 1
      %p215 = por %p213, %p214
      %p217 = scmp.ne.s32.totalorder %s202, %s216
      %p218 = scmp.eq.s32.totalorder %s24, 0
      %p219 = por %p217, %p218
      %s220 = ssub.s32 %s18, %s25
      %p221 = scmp.eq.s32.totalorder %s220, 0
      %s223 = sadd.s32 %s222, 1
      %s224 = scalar_select %p221, %s222, %s223
      %p227 = pneg %p221
      %p228 = scmp.eq.s32.totalorder %s18, 1
      %p229 = por %p227, %p228
      %p230 = scmp.ne.s32.totalorder %s222, %s225
      %p231 = scmp.eq.s32.totalorder %s18, 0
      %p232 = por %p230, %p231
      %p233 = scmp.ne.s32.totalorder %s222, %s225
      %p234 = scmp.eq.s32.totalorder %s23, 1
      %p235 = por %p233, %p234
      %p236 = scmp.ne.s32.totalorder %s225, %s226
      %p237 = scmp.eq.s32.totalorder %s23, 0
      %p238 = por %p236, %p237
      %p239 = scmp.ne.s32.totalorder %s225, %s226
      %p240 = scmp.eq.s32.totalorder %s24, 1
      %p241 = por %p239, %p240
      %p243 = scmp.ne.s32.totalorder %s226, %s242
      %p244 = scmp.eq.s32.totalorder %s24, 0
      %p245 = por %p243, %p244
      %p246 = scmp.le.s32.totalorder 1, %s18
      %p247 = scmp.lt.s32.totalorder %s18, 3
      %p248 = pnand %p246, %p247
      %p249 = pneg %p248
      // Predicated region
      $region9: #{tpu_custom_call.1} parent=5 // pred_check
        _
      $region10: #{tpu_custom_call.1} parent=5 // pred_check_branch
        %251 = sbr.rel (%p248) target = $region12
      $region11: #{tpu_custom_call.1} parent=5 // pred_region
        %s252 = ssub.s32 %s18, 1
        // Predicated region
        $region13: #{tpu_custom_call.1} parent=11 // pred_check
          %p253 = pneg %p65
        $region14: #{tpu_custom_call.1} parent=11 // pred_check_branch
          %255 = sbr.rel (%p253) target = $region16
        $region15: #{tpu_custom_call.1} parent=11 // pred_region
          _
        $region16: #{tpu_custom_call.1} parent=11 // pred_fallthru
          _
        // Predicated region
        $region17: #{tpu_custom_call.1} parent=11 // pred_check
          %p256 = pneg %p86
        $region18: #{tpu_custom_call.1} parent=11 // pred_check_branch
          %258 = sbr.rel (%p256) target = $region20
        $region19: #{tpu_custom_call.1} parent=11 // pred_region
          _
        $region20: #{tpu_custom_call.1} parent=11 // pred_fallthru
          _
        // Predicated region
        $region21: #{tpu_custom_call.1} parent=11 // pred_check
          %p259 = pneg %p107
        $region22: #{tpu_custom_call.1} parent=11 // pred_check_branch
          %261 = sbr.rel (%p259) target = $region24
        $region23: #{tpu_custom_call.1} parent=11 // pred_region
          _
        $region24: #{tpu_custom_call.1} parent=11 // pred_fallthru
          _
        // Predicated region
        $region25: #{tpu_custom_call.1} parent=11 // pred_check
          %p262 = pneg %p128
        $region26: #{tpu_custom_call.1} parent=11 // pred_check_branch
          %264 = sbr.rel (%p262) target = $region28
        $region27: #{tpu_custom_call.1} parent=11 // pred_region
          _
        $region28: #{tpu_custom_call.1} parent=11 // pred_fallthru
          _
        // Predicated region
        $region29: #{tpu_custom_call.1} parent=11 // pred_check
          %p265 = pneg %p149
        $region30: #{tpu_custom_call.1} parent=11 // pred_check_branch
          %267 = sbr.rel (%p265) target = $region32
        $region31: #{tpu_custom_call.1} parent=11 // pred_region
          _
        $region32: #{tpu_custom_call.1} parent=11 // pred_fallthru
          _
        // Predicated region
        $region33: #{tpu_custom_call.1} parent=11 // pred_check
          %p268 = pneg %p170
        $region34: #{tpu_custom_call.1} parent=11 // pred_check_branch
          %270 = sbr.rel (%p268) target = $region36
        $region35: #{tpu_custom_call.1} parent=11 // pred_region
          _
        $region36: #{tpu_custom_call.1} parent=11 // pred_fallthru
          _
        // Predicated region
        $region37: #{tpu_custom_call.1} parent=11 // pred_check
          %p271 = pneg %p191
        $region38: #{tpu_custom_call.1} parent=11 // pred_check_branch
          %273 = sbr.rel (%p271) target = $region40
        $region39: #{tpu_custom_call.1} parent=11 // pred_region
          _
        $region40: #{tpu_custom_call.1} parent=11 // pred_fallthru
          _
        // Predicated region
        $region41: #{tpu_custom_call.1} parent=11 // pred_check
          %p274 = pneg %p212
        $region42: #{tpu_custom_call.1} parent=11 // pred_check_branch
          %276 = sbr.rel (%p274) target = $region44
        $region43: #{tpu_custom_call.1} parent=11 // pred_region
          _
        $region44: #{tpu_custom_call.1} parent=11 // pred_fallthru
          _
      $region12: #{tpu_custom_call.1} parent=5 // pred_fallthru
        _
      %p277 = scmp.lt.s32.totalorder %s18, 2
      // Predicated region
      $region45: #{tpu_custom_call.1} parent=5 // pred_check
        %p278 = pneg %p277
      $region46: #{tpu_custom_call.1} parent=5 // pred_check_branch
        %280 = sbr.rel (%p278) target = $region48
      $region47: #{tpu_custom_call.1} parent=5 // pred_region
        // Predicated region
        $region49: #{tpu_custom_call.1} parent=47 // pred_check
          %p281 = pneg %p38
        $region50: #{tpu_custom_call.1} parent=47 // pred_check_branch
          %283 = sbr.rel (%p281) target = $region52
        $region51: #{tpu_custom_call.1} parent=47 // pred_region
          %p284 = scmp.lt.s32.totalorder %s18, 1
          %s285 = scalar_select %p284, %s18, 1
          %s286 = smul.addr %s285, 4
          %s287 = smul.addr %s286, 8
          %s288 = scalar_lea.vmem %s0, %s287
        $region52: #{tpu_custom_call.1} parent=47 // pred_fallthru
          _
      $region48: #{tpu_custom_call.1} parent=5 // pred_fallthru
        _
      %p289 = scmp.le.s32.totalorder 1, %s18
      %p290 = scmp.lt.s32.totalorder %s18, 3
      %p291 = pnand %p289, %p290
      %p292 = pneg %p291
      // Predicated region
      $region53: #{tpu_custom_call.1} parent=5 // pred_check
        _
      $region54: #{tpu_custom_call.1} parent=5 // pred_check_branch
        %294 = sbr.rel (%p291) target = $region56
      $region55: #{tpu_custom_call.1} parent=5 // pred_region
        %s295 = ssub.s32 %s18, 1
        %p296 = scmp.lt.s32.totalorder %s23, 1
        %s297 = scalar_select %p296, %s23, 1
        %s298 = smul.addr %s297, 4
        %s299 = smul.addr %s298, 8
        %s300 = scalar_lea.vmem %s0, %s299
        %p301 = pneg %p44
        %p302 = pneg %p41
        %p303 = pneg %p65
        %p304 = pneg %p62
        %p305 = pneg %p86
        %p306 = pneg %p83
        %p307 = pneg %p107
        %p308 = pneg %p104
        %p309 = pneg %p128
        %p310 = pneg %p125
        %p311 = pneg %p149
        %p312 = pneg %p146
        %p313 = pneg %p170
        %p314 = pneg %p167
        %p315 = pneg %p191
        %p316 = pneg %p188
        %p317 = pneg %p212
        %p318 = pneg %p209
        %p319 = pneg %p238
        %p320 = pneg %p235
        %s321 = sand.u32 %s225, 1
        %s322 = scalar_lea.sflag [#allocation3], %s321
        %s323 = sand.u32 %s225, 1
        %s324 = smul.addr %s323, 32
        %s325 = scalar_lea.vmem [#allocation2], %s324
        %p326 = scmp.lt.s32.totalorder %s23, 1
        %s327 = scalar_select %p326, %s23, 1
        %s328 = smul.addr %s327, 4
        %s329 = smul.addr %s328, 8
        %s330 = scalar_lea.vmem %s0, %s329
        %v331 = vld [vmem:[%s1] sm:$0xff]
        %v332 = vld [vmem:[%s1 + $0x8] sm:$0xff]
        %v333 = vld [vmem:[%s1 + $0x10] sm:$0xff]
        %v334 = vld [vmem:[%s1 + $0x18] sm:$0xff]
        %v335 = vld [vmem:[%s1 + $0x20] sm:$0xff]
        %v336 = vld [vmem:[%s1 + $0x28] sm:$0xff]
        %v337 = vld [vmem:[%s1 + $0x30] sm:$0xff]
        %v338 = vld [vmem:[%s1 + $0x38] sm:$0xff]
        %v339 = vld [vmem:[%s1 + $0x40] sm:$0xff]
        %v340 = vld [vmem:[%s1 + $0x48] sm:$0xff]
        %v341 = vld [vmem:[%s1 + $0x50] sm:$0xff]
        %v342 = vld [vmem:[%s1 + $0x58] sm:$0xff]
        %v343 = vld [vmem:[%s2] sm:$0x3f]
        %v344 = vld [vmem:[%s3] sm:$0x3]
        %v345 = vld [vmem:[%s5] sm:$0x3]
        %v346 = vld [vmem:[%s7] sm:$0xff]
        %v347 = vld [vmem:[%s7 + $0x8] sm:$0xff]
        %v348 = vld [vmem:[%s7 + $0x10] sm:$0xff]
        %v349 = vld [vmem:[%s7 + $0x18] sm:$0xff]
        %v350 = vld [vmem:[%s4] sm:$0x3]
        %v351 = vld [vmem:[%s6] sm:$0x3]
        %v352 = vld [vmem:[%s8] sm:$0xff]
        %v353 = vld [vmem:[%s8 + $0x8] sm:$0xff]
        %v354 = vld [vmem:[%s8 + $0x10] sm:$0xff]
        %v355 = vld [vmem:[%s8 + $0x18] sm:$0xff]
        %v356 = vlaneseq
        %v357 = vand.u32 %v356, 127
        %vm358 = vcmp.lt.s32.totalorder %v357, 0
        %v359 = vsub.s32 0, %v357
        %v360 = vsel %vm358, %v359, %v357
        %v361 = vmul.u32.u64.compose %v360, 2863311531
        %v362 = vextract.low.u32 %v361
        %v363 = vextract.high.u32 %v361
        %v364 = vshrl.u32 %v363, 1
        %v365 = vmul.u32 %v364, 3
        %v366 = vsub.s32 %v360, %v365
        %v367 = vsub.s32 0, %v366
        %v368 = vsel %vm358, %v367, %v366
        %vm369 = vcmp.ne.s32.totalorder %v368, 0
        %vm370 = vcmp.lt.s32.totalorder %v368, 0
        %vm371 = vmand %vm370, %vm369
        %v372 = vadd.s32 %v368, 3
        %v373 = vsel %vm371, %v372, %v368
        %vm374 = vcmp.ne.s32.totalorder %v373, 2
        %v375 = vld [vmem:[%s330] sm:$0xff]
        %v376 = vld [vmem:[%s330 + $0x8] sm:$0xff]
        %v377 = vld [vmem:[%s330 + $0x10] sm:$0xff]
        %v378 = vld [vmem:[%s330 + $0x18] sm:$0xff]
        %vm379 = vcmask 785408
        %v381 = vsel %vm379, %v375, 0
        %v384 = vsel %vm379, %v376, 0
        %v387 = vsel %vm379, %v377, 0
        %v390 = vsel %vm379, %v378, 0
        %392 = vmatprep.subr.mxu0 0.0
        %393 = vmatpush1.msra.mxu0 %v331
        %394 = vmatprep.subr.mxu0 0.0
        %395 = vmatpush1.msra.mxu0 %v332
        %396 = vmatprep.subr.mxu0 0.0
        %397 = vmatpush1.msra.mxu0 %v333
        %398 = vmatprep.subr.mxu0 0.0
        %399 = vmatpush1.msra.mxu0 %v334
        %400 = vmatprep.subr.mxu0 0.0
        %401 = vmatpush1.msra.mxu0 %v335
        %402 = vmatprep.subr.mxu0 0.0
        %403 = vmatpush1.msra.mxu0 %v336
        %404 = vmatprep.subr.mxu0 0.0
        %405 = vmatpush1.msra.mxu0 %v337
        %406 = vmatprep.subr.mxu0 0.0
        %407 = vmatpush1.msra.mxu0 %v338
        %408 = vmatprep.subr.mxu0 0.0
        %409 = vmatpush1.msra.mxu0 %v339
        %410 = vmatprep.subr.mxu0 0.0
        %411 = vmatpush1.msra.mxu0 %v340
        %412 = vmatprep.subr.mxu0 0.0
        %413 = vmatpush1.msra.mxu0 %v341
        %414 = vmatprep.subr.mxu0 0.0
        %415 = vmatpush1.msra.mxu0 %v342
        %416 = vmatprep.subr.mxu0 0.0
        %417 = vmatpush1.msra.mxu0 0.0
        %418 = vmatprep.subr.mxu0 0.0
        %419 = vmatpush1.msra.mxu0 0.0
        %420 = vmatprep.subr.mxu0 0.0
        %421 = vmatpush1.msra.mxu0 0.0
        %422 = vmatprep.subr.mxu0 0.0
        %423 = vmatpush1.msra.mxu0 0.0
        %424 = vmatprep.subr.mxu0 0.0
        %425 = vmatpush1.msra.mxu0 0.0
        %426 = vmatprep.subr.mxu0 0.0
        %427 = vmatpush1.msra.mxu0 0.0
        %428 = vmatprep.subr.mxu0 0.0
        %429 = vmatpush1.msra.mxu0 0.0
        %430 = vmatprep.subr.mxu0 0.0
        %431 = vmatpush1.msra.mxu0 0.0
        %432 = vmatprep.subr.mxu0 0.0
        %433 = vmatpush1.msra.mxu0 0.0
        %434 = vmatprep.subr.mxu0 0.0
        %435 = vmatpush1.msra.mxu0 0.0
        %436 = vmatprep.subr.mxu0 0.0
        %437 = vmatpush1.msra.mxu0 0.0
        %438 = vmatprep.subr.mxu0 0.0
        %439 = vmatpush1.msra.mxu0 0.0
        %440 = vmatprep.subr.mxu0 0.0
        %441 = vmatpush1.msra.mxu0 0.0
        %442 = vmatprep.subr.mxu0 0.0
        %443 = vmatpush1.msra.mxu0 0.0
        %444 = vmatprep.subr.mxu0 0.0
        %445 = vmatpush1.msra.mxu0 0.0
        %446 = vmatprep.subr.mxu0 0.0
        %447 = vmatpush1.msra.mxu0 0.0
        %448 = vmatprep.subr.mxu0 0.0
        %449 = vmatpush1.msra.mxu0 0.0
        %450 = vmatprep.subr.mxu0 0.0
        %451 = vmatpush1.msra.mxu0 0.0
        %452 = vmatprep.subr.mxu0 0.0
        %453 = vmatpush1.msra.mxu0 0.0
        %454 = vmatprep.subr.mxu0 0.0
        %455 = vmatpush1.msra.mxu0 0.0
        %456 = vmatprep.mubr.f32.mxu0 0.0
        %457 = vmatmul.mubr.f32.gmra.mrb[0].mxu0 %v381
        %v458 = vpop.f32.mrb[0].mxu0
        %v459 = vadd.f32 0.0, %v458
        %v460 = vpop.f32.mrb[0].mxu0
        %461 = vmatprep.mubr.f32.mxu0 0.0
        %462 = vmatmul.mubr.f32.gmra.mrb[0].mxu0 %v384
        %v463 = vpop.f32.mrb[0].mxu0
        %v464 = vadd.f32 0.0, %v463
        %v465 = vpop.f32.mrb[0].mxu0
        %466 = vmatprep.mubr.f32.mxu0 0.0
        %467 = vmatmul.mubr.f32.gmra.mrb[0].mxu0 %v387
        %v468 = vpop.f32.mrb[0].mxu0
        %v469 = vadd.f32 0.0, %v468
        %v470 = vpop.f32.mrb[0].mxu0
        %471 = vmatprep.mubr.f32.mxu0 0.0
        %472 = vmatmul.mubr.f32.gmra.mrb[0].mxu0 %v390
        %v473 = vpop.f32.mrb[0].mxu0
        %v474 = vadd.f32 0.0, %v473
        %v475 = vpop.f32.mrb[0].mxu0
        %476 = vdwg.mxu0
        %478 = vset.pattern.permute.xlu0 0
        %479 = vperm.xlu0 %478, %v350
        %v480 = vpop.permute.xlu0 %479
        %vm482 = vcmask 261120
        %v484 = vsel %vm482, %v344, 0
        %486 = vmatprep.subr.mxu0 0.0
        %487 = vmatpush1.msra.mxu0 %v459
        %488 = vmatprep.subr.mxu0 0.0
        %489 = vmatpush1.msra.mxu0 %v464
        %490 = vmatprep.subr.mxu0 0.0
        %491 = vmatpush1.msra.mxu0 %v469
        %492 = vmatprep.subr.mxu0 0.0
        %493 = vmatpush1.msra.mxu0 %v474
        %494 = vmatprep.subr.mxu0 0.0
        %495 = vmatpush1.msra.mxu0 0.0
        %496 = vmatprep.subr.mxu0 0.0
        %497 = vmatpush1.msra.mxu0 0.0
        %498 = vmatprep.subr.mxu0 0.0
        %499 = vmatpush1.msra.mxu0 0.0
        %500 = vmatprep.subr.mxu0 0.0
        %501 = vmatpush1.msra.mxu0 0.0
        %502 = vmatprep.subr.mxu0 0.0
        %503 = vmatpush1.msra.mxu0 0.0
        %504 = vmatprep.subr.mxu0 0.0
        %505 = vmatpush1.msra.mxu0 0.0
        %506 = vmatprep.subr.mxu0 0.0
        %507 = vmatpush1.msra.mxu0 0.0
        %508 = vmatprep.subr.mxu0 0.0
        %509 = vmatpush1.msra.mxu0 0.0
        %510 = vmatprep.subr.mxu0 0.0
        %511 = vmatpush1.msra.mxu0 0.0
        %512 = vmatprep.subr.mxu0 0.0
        %513 = vmatpush1.msra.mxu0 0.0
        %514 = vmatprep.subr.mxu0 0.0
        %515 = vmatpush1.msra.mxu0 0.0
        %516 = vmatprep.subr.mxu0 0.0
        %517 = vmatpush1.msra.mxu0 0.0
        %518 = vmatprep.subr.mxu0 0.0
        %519 = vmatpush1.msra.mxu0 0.0
        %520 = vmatprep.subr.mxu0 0.0
        %521 = vmatpush1.msra.mxu0 0.0
        %522 = vmatprep.subr.mxu0 0.0
        %523 = vmatpush1.msra.mxu0 0.0
        %524 = vmatprep.subr.mxu0 0.0
        %525 = vmatpush1.msra.mxu0 0.0
        %526 = vmatprep.subr.mxu0 0.0
        %527 = vmatpush1.msra.mxu0 0.0
        %528 = vmatprep.subr.mxu0 0.0
        %529 = vmatpush1.msra.mxu0 0.0
        %530 = vmatprep.subr.mxu0 0.0
        %531 = vmatpush1.msra.mxu0 0.0
        %532 = vmatprep.subr.mxu0 0.0
        %533 = vmatpush1.msra.mxu0 0.0
        %534 = vmatprep.subr.mxu0 0.0
        %535 = vmatpush1.msra.mxu0 0.0
        %536 = vmatprep.subr.mxu0 0.0
        %537 = vmatpush1.msra.mxu0 0.0
        %538 = vmatprep.subr.mxu0 0.0
        %539 = vmatpush1.msra.mxu0 0.0
        %540 = vmatprep.subr.mxu0 0.0
        %541 = vmatpush1.msra.mxu0 0.0
        %542 = vmatprep.subr.mxu0 0.0
        %543 = vmatpush1.msra.mxu0 0.0
        %544 = vmatprep.subr.mxu0 0.0
        %545 = vmatpush1.msra.mxu0 0.0
        %546 = vmatprep.subr.mxu0 0.0
        %547 = vmatpush1.msra.mxu0 0.0
        %548 = vmatprep.subr.mxu0 0.0
        %549 = vmatpush1.msra.mxu0 0.0
        %550 = vmatprep.mubr.f32.mxu0 0.0
        %551 = vmatmul.mubr.f32.gmra.mrb[0].mxu0 %v484
        %v552 = vpop.f32.mrb[0].mxu0
        %v553 = vadd.f32 %v480, %v552
        %v554 = vpop.f32.mrb[0].mxu0
        %555 = vdwg.mxu0
        %557 = vset.pattern.permute.xlu0 0
        %558 = vperm.xlu0 %557, %v351
        %v559 = vpop.permute.xlu0 %558
        %vm561 = vcmask 15360
        %v563 = vsel %vm561, %v345, 0
        %vm565 = vcmask 1041408
        %v567 = vsel %vm565, %v553, 0
        %569 = vmatprep.subr.mxu0 0.0
        %570 = vmatpush1.msra.mxu0 %v567
        %571 = vmatprep.subr.mxu0 0.0
        %572 = vmatpush1.msra.mxu0 0.0
        %573 = vmatprep.subr.mxu0 0.0
        %574 = vmatpush1.msra.mxu0 0.0
        %575 = vmatprep.subr.mxu0 0.0
        %576 = vmatpush1.msra.mxu0 0.0
        %577 = vmatprep.subr.mxu0 0.0
        %578 = vmatpush1.msra.mxu0 0.0
        %579 = vmatprep.subr.mxu0 0.0
        %580 = vmatpush1.msra.mxu0 0.0
        %581 = vmatprep.subr.mxu0 0.0
        %582 = vmatpush1.msra.mxu0 0.0
        %583 = vmatprep.subr.mxu0 0.0
        %584 = vmatpush1.msra.mxu0 0.0
        %585 = vmatprep.subr.mxu0 0.0
        %586 = vmatpush1.msra.mxu0 0.0
        %587 = vmatprep.subr.mxu0 0.0
        %588 = vmatpush1.msra.mxu0 0.0
        %589 = vmatprep.subr.mxu0 0.0
        %590 = vmatpush1.msra.mxu0 0.0
        %591 = vmatprep.subr.mxu0 0.0
        %592 = vmatpush1.msra.mxu0 0.0
        %593 = vmatprep.subr.mxu0 0.0
        %594 = vmatpush1.msra.mxu0 0.0
        %595 = vmatprep.subr.mxu0 0.0
        %596 = vmatpush1.msra.mxu0 0.0
        %597 = vmatprep.subr.mxu0 0.0
        %598 = vmatpush1.msra.mxu0 0.0
        %599 = vmatprep.subr.mxu0 0.0
        %600 = vmatpush1.msra.mxu0 0.0
        %601 = vmatprep.subr.mxu0 0.0
        %602 = vmatpush1.msra.mxu0 0.0
        %603 = vmatprep.subr.mxu0 0.0
        %604 = vmatpush1.msra.mxu0 0.0
        %605 = vmatprep.subr.mxu0 0.0
        %606 = vmatpush1.msra.mxu0 0.0
        %607 = vmatprep.subr.mxu0 0.0
        %608 = vmatpush1.msra.mxu0 0.0
        %609 = vmatprep.subr.mxu0 0.0
        %610 = vmatpush1.msra.mxu0 0.0
        %611 = vmatprep.subr.mxu0 0.0
        %612 = vmatpush1.msra.mxu0 0.0
        %613 = vmatprep.subr.mxu0 0.0
        %614 = vmatpush1.msra.mxu0 0.0
        %615 = vmatprep.subr.mxu0 0.0
        %616 = vmatpush1.msra.mxu0 0.0
        %617 = vmatprep.subr.mxu0 0.0
        %618 = vmatpush1.msra.mxu0 0.0
        %619 = vmatprep.subr.mxu0 0.0
        %620 = vmatpush1.msra.mxu0 0.0
        %621 = vmatprep.subr.mxu0 0.0
        %622 = vmatpush1.msra.mxu0 0.0
        %623 = vmatprep.subr.mxu0 0.0
        %624 = vmatpush1.msra.mxu0 0.0
        %625 = vmatprep.subr.mxu0 0.0
        %626 = vmatpush1.msra.mxu0 0.0
        %627 = vmatprep.subr.mxu0 0.0
        %628 = vmatpush1.msra.mxu0 0.0
        %629 = vmatprep.subr.mxu0 0.0
        %630 = vmatpush1.msra.mxu0 0.0
        %631 = vmatprep.subr.mxu0 0.0
        %632 = vmatpush1.msra.mxu0 0.0
        %633 = vmatprep.mubr.f32.mxu0 0.0
        %634 = vmatmul.mubr.f32.gmra.mrb[0].mxu0 %v563
        %v635 = vpop.f32.mrb[0].mxu0
        %v636 = vadd.f32 %v559, %v635
        %v637 = vpop.f32.mrb[0].mxu0
        %638 = vdwg.mxu0
        %640 = vrot.lane.b32.xlu0 %v636, 127
        %v641 = vpop.permute.xlu0 %640
        %643 = vrot.lane.b32.xlu0 %v636, 5
        %v644 = vpop.permute.xlu0 %643
        %vm646 = vcmask 39936
        %v647 = vsel %vm646, %v641, %v644
        %v648 = vsub.f32 %v647, %v553
        %v649 = vsel %vm374, %v648, 0.0
        %651 = vset.pattern.permute.xlu0 0
        %652 = vperm.xlu0 %651, %v352
        %v653 = vpop.permute.xlu0 %652
        %656 = vset.pattern.permute.xlu0 0
        %657 = vperm.xlu0 %656, %v353
        %v658 = vpop.permute.xlu0 %657
        %661 = vset.pattern.permute.xlu0 0
        %662 = vperm.xlu0 %661, %v354
        %v663 = vpop.permute.xlu0 %662
        %666 = vset.pattern.permute.xlu0 0
        %667 = vperm.xlu0 %666, %v355
        %v668 = vpop.permute.xlu0 %667
        %v671 = vsel %vm561, %v346, 0
        %v674 = vsel %vm561, %v347, 0
        %v677 = vsel %vm561, %v348, 0
        %v680 = vsel %vm561, %v349, 0
        %v683 = vsel %vm565, %v649, 0
        %685 = vmatprep.subr.mxu0 0.0
        %686 = vmatpush1.msra.mxu0 %v683
        %687 = vmatprep.subr.mxu0 0.0
        %688 = vmatpush1.msra.mxu0 0.0
        %689 = vmatprep.subr.mxu0 0.0
        %690 = vmatpush1.msra.mxu0 0.0
        %691 = vmatprep.subr.mxu0 0.0
        %692 = vmatpush1.msra.mxu0 0.0
        %693 = vmatprep.subr.mxu0 0.0
        %694 = vmatpush1.msra.mxu0 0.0
        %695 = vmatprep.subr.mxu0 0.0
        %696 = vmatpush1.msra.mxu0 0.0
        %697 = vmatprep.subr.mxu0 0.0
        %698 = vmatpush1.msra.mxu0 0.0
        %699 = vmatprep.subr.mxu0 0.0
        %700 = vmatpush1.msra.mxu0 0.0
        %701 = vmatprep.subr.mxu0 0.0
        %702 = vmatpush1.msra.mxu0 0.0
        %703 = vmatprep.subr.mxu0 0.0
        %704 = vmatpush1.msra.mxu0 0.0
        %705 = vmatprep.subr.mxu0 0.0
        %706 = vmatpush1.msra.mxu0 0.0
        %707 = vmatprep.subr.mxu0 0.0
        %708 = vmatpush1.msra.mxu0 0.0
        %709 = vmatprep.subr.mxu0 0.0
        %710 = vmatpush1.msra.mxu0 0.0
        %711 = vmatprep.subr.mxu0 0.0
        %712 = vmatpush1.msra.mxu0 0.0
        %713 = vmatprep.subr.mxu0 0.0
        %714 = vmatpush1.msra.mxu0 0.0
        %715 = vmatprep.subr.mxu0 0.0
        %716 = vmatpush1.msra.mxu0 0.0
        %717 = vmatprep.subr.mxu0 0.0
        %718 = vmatpush1.msra.mxu0 0.0
        %719 = vmatprep.subr.mxu0 0.0
        %720 = vmatpush1.msra.mxu0 0.0
        %721 = vmatprep.subr.mxu0 0.0
        %722 = vmatpush1.msra.mxu0 0.0
        %723 = vmatprep.subr.mxu0 0.0
        %724 = vmatpush1.msra.mxu0 0.0
        %725 = vmatprep.subr.mxu0 0.0
        %726 = vmatpush1.msra.mxu0 0.0
        %727 = vmatprep.subr.mxu0 0.0
        %728 = vmatpush1.msra.mxu0 0.0
        %729 = vmatprep.subr.mxu0 0.0
        %730 = vmatpush1.msra.mxu0 0.0
        %731 = vmatprep.subr.mxu0 0.0
        %732 = vmatpush1.msra.mxu0 0.0
        %733 = vmatprep.subr.mxu0 0.0
        %734 = vmatpush1.msra.mxu0 0.0
        %735 = vmatprep.subr.mxu0 0.0
        %736 = vmatpush1.msra.mxu0 0.0
        %737 = vmatprep.subr.mxu0 0.0
        %738 = vmatpush1.msra.mxu0 0.0
        %739 = vmatprep.subr.mxu0 0.0
        %740 = vmatpush1.msra.mxu0 0.0
        %741 = vmatprep.subr.mxu0 0.0
        %742 = vmatpush1.msra.mxu0 0.0
        %743 = vmatprep.subr.mxu0 0.0
        %744 = vmatpush1.msra.mxu0 0.0
        %745 = vmatprep.subr.mxu0 0.0
        %746 = vmatpush1.msra.mxu0 0.0
        %747 = vmatprep.subr.mxu0 0.0
        %748 = vmatpush1.msra.mxu0 0.0
        %749 = vmatprep.mubr.f32.mxu0 0.0
        %750 = vmatmul.mubr.f32.gmra.mrb[0].mxu0 %v671
        %v751 = vpop.f32.mrb[0].mxu0
        %v752 = vadd.f32 %v653, %v751
        %v753 = vpop.f32.mrb[0].mxu0
        %754 = vmatprep.mubr.f32.mxu0 0.0
        %755 = vmatmul.mubr.f32.gmra.mrb[0].mxu0 %v674
        %v756 = vpop.f32.mrb[0].mxu0
        %v757 = vadd.f32 %v658, %v756
        %v758 = vpop.f32.mrb[0].mxu0
        %759 = vmatprep.mubr.f32.mxu0 0.0
        %760 = vmatmul.mubr.f32.gmra.mrb[0].mxu0 %v677
        %v761 = vpop.f32.mrb[0].mxu0
        %v762 = vadd.f32 %v663, %v761
        %v763 = vpop.f32.mrb[0].mxu0
        %764 = vmatprep.mubr.f32.mxu0 0.0
        %765 = vmatmul.mubr.f32.gmra.mrb[0].mxu0 %v680
        %v766 = vpop.f32.mrb[0].mxu0
        %v767 = vadd.f32 %v668, %v766
        %v768 = vpop.f32.mrb[0].mxu0
        %769 = vdwg.mxu0
        %v770 = vxor.u32 %v752, 2147483648
        %v771 = vxor.u32 %v757, 2147483648
        %v772 = vxor.u32 %v762, 2147483648
        %v773 = vxor.u32 %v767, 2147483648
        %v774 = vmul.f32 %v770, 1.442695
        %v775 = vpow.pop %v774
        %v776 = vmul.f32 %v771, 1.442695
        %v777 = vpow.pop %v776
        %v778 = vmul.f32 %v772, 1.442695
        %v779 = vpow.pop %v778
        %v780 = vmul.f32 %v773, 1.442695
        %v781 = vpow.pop %v780
        %v782 = vadd.f32 %v775, 1.0
        %v783 = vadd.f32 %v777, 1.0
        %v784 = vadd.f32 %v779, 1.0
        %v785 = vadd.f32 %v781, 1.0
        %v786 = vrcp.pop %v782
        %v787 = vmul.f32 1.0, %v786
        %v788 = vrcp.pop %v783
        %v789 = vmul.f32 1.0, %v788
        %v790 = vrcp.pop %v784
        %v791 = vmul.f32 1.0, %v790
        %v792 = vrcp.pop %v785
        %v793 = vmul.f32 1.0, %v792
        %vm794 = vcmask 48128
        %v796 = vsel %vm794, %v787, 0
        %v799 = vsel %vm794, %v789, 0
        %v802 = vsel %vm794, %v791, 0
        %v805 = vsel %vm794, %v793, 0
        %vm807 = vcmask 1045504
        %v809 = vsel %vm807, %v343, 0
        %811 = vmatprep.subr.mxu0 0.0
        %812 = vmatpush1.msra.mxu0 %v809
        %813 = vmatprep.subr.mxu0 0.0
        %814 = vmatpush1.msra.mxu0 0.0
        %815 = vmatprep.subr.mxu0 0.0
        %816 = vmatpush1.msra.mxu0 0.0
        %817 = vmatprep.subr.mxu0 0.0
        %818 = vmatpush1.msra.mxu0 0.0
        %819 = vmatprep.subr.mxu0 0.0
        %820 = vmatpush1.msra.mxu0 0.0
        %821 = vmatprep.subr.mxu0 0.0
        %822 = vmatpush1.msra.mxu0 0.0
        %823 = vmatprep.subr.mxu0 0.0
        %824 = vmatpush1.msra.mxu0 0.0
        %825 = vmatprep.subr.mxu0 0.0
        %826 = vmatpush1.msra.mxu0 0.0
        %827 = vmatprep.subr.mxu0 0.0
        %828 = vmatpush1.msra.mxu0 0.0
        %829 = vmatprep.subr.mxu0 0.0
        %830 = vmatpush1.msra.mxu0 0.0
        %831 = vmatprep.subr.mxu0 0.0
        %832 = vmatpush1.msra.mxu0 0.0
        %833 = vmatprep.subr.mxu0 0.0
        %834 = vmatpush1.msra.mxu0 0.0
        %835 = vmatprep.subr.mxu0 0.0
        %836 = vmatpush1.msra.mxu0 0.0
        %837 = vmatprep.subr.mxu0 0.0
        %838 = vmatpush1.msra.mxu0 0.0
        %839 = vmatprep.subr.mxu0 0.0
        %840 = vmatpush1.msra.mxu0 0.0
        %841 = vmatprep.subr.mxu0 0.0
        %842 = vmatpush1.msra.mxu0 0.0
        %843 = vmatprep.subr.mxu0 0.0
        %844 = vmatpush1.msra.mxu0 0.0
        %845 = vmatprep.subr.mxu0 0.0
        %846 = vmatpush1.msra.mxu0 0.0
        %847 = vmatprep.subr.mxu0 0.0
        %848 = vmatpush1.msra.mxu0 0.0
        %849 = vmatprep.subr.mxu0 0.0
        %850 = vmatpush1.msra.mxu0 0.0
        %851 = vmatprep.subr.mxu0 0.0
        %852 = vmatpush1.msra.mxu0 0.0
        %853 = vmatprep.subr.mxu0 0.0
        %854 = vmatpush1.msra.mxu0 0.0
        %855 = vmatprep.subr.mxu0 0.0
        %856 = vmatpush1.msra.mxu0 0.0
        %857 = vmatprep.subr.mxu0 0.0
        %858 = vmatpush1.msra.mxu0 0.0
        %859 = vmatprep.subr.mxu0 0.0
        %860 = vmatpush1.msra.mxu0 0.0
        %861 = vmatprep.subr.mxu0 0.0
        %862 = vmatpush1.msra.mxu0 0.0
        %863 = vmatprep.subr.mxu0 0.0
        %864 = vmatpush1.msra.mxu0 0.0
        %865 = vmatprep.subr.mxu0 0.0
        %866 = vmatpush1.msra.mxu0 0.0
        %867 = vmatprep.subr.mxu0 0.0
        %868 = vmatpush1.msra.mxu0 0.0
        %869 = vmatprep.subr.mxu0 0.0
        %870 = vmatpush1.msra.mxu0 0.0
        %871 = vmatprep.subr.mxu0 0.0
        %872 = vmatpush1.msra.mxu0 0.0
        %873 = vmatprep.subr.mxu0 0.0
        %874 = vmatpush1.msra.mxu0 0.0
        %875 = vmatprep.mubr.f32.mxu0 0.0
        %876 = vmatmul.mubr.f32.gmra.mrb[0].mxu0 %v796
        %v877 = vpop.f32.mrb[0].mxu0
        %v878 = vadd.f32 0.0, %v877
        %v879 = vpop.f32.mrb[0].mxu0
        %880 = vmatprep.mubr.f32.mxu0 0.0
        %881 = vmatmul.mubr.f32.gmra.mrb[0].mxu0 %v799
        %v882 = vpop.f32.mrb[0].mxu0
        %v883 = vadd.f32 0.0, %v882
        %v884 = vpop.f32.mrb[0].mxu0
        %885 = vmatprep.mubr.f32.mxu0 0.0
        %886 = vmatmul.mubr.f32.gmra.mrb[0].mxu0 %v802
        %v887 = vpop.f32.mrb[0].mxu0
        %v888 = vadd.f32 0.0, %v887
        %v889 = vpop.f32.mrb[0].mxu0
        %890 = vmatprep.mubr.f32.mxu0 0.0
        %891 = vmatmul.mubr.f32.gmra.mrb[0].mxu0 %v805
        %v892 = vpop.f32.mrb[0].mxu0
        %v893 = vadd.f32 0.0, %v892
        %v894 = vpop.f32.mrb[0].mxu0
        %895 = vdwg.mxu0
        %v896 = vmul.f32 %v375, %v878
        %v897 = vmul.f32 %v376, %v883
        %v898 = vmul.f32 %v377, %v888
        %v899 = vmul.f32 %v378, %v893
        %900 = vst.msk [vmem:[%s325] sm:$0xff] %vm379, %v896
        %901 = vst.msk [vmem:[%s325 + $0x8] sm:$0xff] %vm379, %v897
        %902 = vst.msk [vmem:[%s325 + $0x10] sm:$0xff] %vm379, %v898
        %903 = vst.msk [vmem:[%s325 + $0x18] sm:$0xff] %vm379, %v899
        %s904 = sand.u32 %s225, 1
        %s905 = scalar_lea.sflag [#allocation3], %s904
        %s906 = sand.u32 %s225, 1
        %s907 = smul.addr %s906, 32
        %s908 = scalar_lea.vmem [#allocation2], %s907
        // Predicated region
        $region57: #{tpu_custom_call.1} parent=55 // pred_check
          %p909 = pneg %p235
        $region58: #{tpu_custom_call.1} parent=55 // pred_check_branch
          %911 = sbr.rel (%p909) target = $region60
        $region59: #{tpu_custom_call.1} parent=55 // pred_region
          %s913 = ssub.s32 512, 512
          %914 = vsyncadd %s905, %s913
          %s915 = smul.addr %s23, 4
          %s916 = smul.addr %s915, 128
          %s917 = scalar_lea.hbm %s9, %s916
          %s918 = sshll.u32 %s908, 4
          %s919 = int_to_ptr.vmem [resolvable:$true] %s918
          %924 = dma.vmem_to_hbm [thread:$0]  %s919, 512, %s917, %s905, 128, 128, 8
        $region60: #{tpu_custom_call.1} parent=55 // pred_fallthru
          _
      $region56: #{tpu_custom_call.1} parent=5 // pred_fallthru
        _
      %p925 = scmp.le.s32.totalorder 2, %s18
      // Predicated region
      $region61: #{tpu_custom_call.1} parent=5 // pred_check
        %p926 = pneg %p925
      $region62: #{tpu_custom_call.1} parent=5 // pred_check_branch
        %928 = sbr.rel (%p926) target = $region64
      $region63: #{tpu_custom_call.1} parent=5 // pred_region
        %s929 = ssub.s32 %s18, 2
        // Predicated region
        $region65: #{tpu_custom_call.1} parent=63 // pred_check
          %p930 = pneg %p241
        $region66: #{tpu_custom_call.1} parent=63 // pred_check_branch
          %932 = sbr.rel (%p930) target = $region68
        $region67: #{tpu_custom_call.1} parent=63 // pred_region
          %s933 = sand.u32 %s226, 1
          %s934 = scalar_lea.sflag [#allocation3], %s933
          %s935 = sand.u32 %s226, 1
          %s936 = smul.addr %s935, 32
          %s937 = scalar_lea.vmem [#allocation2], %s936
          %938 = dma.done %s934, 512
        $region68: #{tpu_custom_call.1} parent=63 // pred_fallthru
          _
      $region64: #{tpu_custom_call.1} parent=5 // pred_fallthru
        _
    $region6: #{tpu_custom_call.1} parent=1 // loop_footer
      %s22 = sadd.s32 1, %s18
    $region7: #{tpu_custom_call.1} parent=1 // loop_footer_branch
      %17 = sbr.rel target = $region3
    $region8: #{tpu_custom_call.1} parent=1 // loop_exit
      _
    %939 = vsyncpa [#allocation3], 1
    %s940 = scalar_lea.sflag [#allocation3], 1
    %941 = vsyncpa %s940, 1

</llo_original>
